<compile_context>
chip_gen: v6e
topology: v6e:2x2x1
jax: 0.10.0
libtpu: 0.0.40
codegen_flags: <defaults>
</compile_context>

<pallas_src>
import functools

import jax
import jax.numpy as jnp
from jax.experimental import pallas as pl
from jax.experimental.pallas import tpu as pltpu

IN_DIM = 28 * 28   # 784 (kept unpadded in HBM; MXU pads K internally)
H1 = 100
H2 = 100
OUT_DIM = 10

# Lane-aligned hidden/output widths (last dims multiples of 128).
H_PAD = 128        # 100 -> 128
OUT_PAD = 128      # 10  -> 128 (lane-dense output block; wrapper slices [:, :10])


def _mlp_kernel(x_ref, w1_ref, b1_ref, w2_ref, b2_ref, w3_ref, b3_ref, out_ref):
    """One batch tile: 3 sampled-linear layers + relu + masked log_softmax."""

    def lin(h, w_ref, b_ref):
        # Matmul dtype follows the weight dtype (f32 or bf16); f32 accumulation,
        # f32 bias add.
        return jnp.dot(h.astype(w_ref.dtype), w_ref[...],
                       preferred_element_type=jnp.float32) + b_ref[...]

    h1 = lin(x_ref[...], w1_ref, b1_ref)                 # (TILE_B, H_PAD), no relu (layer 1)
    h2 = jnp.maximum(lin(h1, w2_ref, b2_ref), 0.0)       # (TILE_B, H_PAD)
    h3 = jnp.maximum(lin(h2, w3_ref, b3_ref), 0.0)       # (TILE_B, OUT_PAD)

    # log_softmax over the first OUT_DIM lanes only (padded lanes masked to -inf).
    lane = jax.lax.broadcasted_iota(jnp.int32, h3.shape, 1)
    h3m = jnp.where(lane < OUT_DIM, h3, -jnp.inf)
    m = jnp.max(h3m, axis=1, keepdims=True)
    lse = jnp.log(jnp.sum(jnp.exp(h3m - m), axis=1, keepdims=True)) + m
    # Padded output lanes hold garbage; the wrapper slices them away.
    out_ref[...] = h3 - lse


def _pad2d(a, rows, cols):
    r, c = a.shape
    return jnp.pad(a, ((0, rows - r), (0, cols - c)))


def _sample_and_pack(layer_params, layer_eps, in_rows, out_pad, w_dtype):
    """Reparameterized sample in the wrapper; transpose to (in, out); zero-pad."""
    weight_mu, weight_phi, bias_mu, bias_phi = layer_params
    eps_w, eps_b = layer_eps
    w = weight_mu + jax.nn.softplus(weight_phi) * eps_w          # (out, in)
    b = bias_mu[None, :] + jax.nn.softplus(bias_phi) * eps_b     # (1, out)
    w_t = w.T.astype(jnp.float32)                                # (in, out)  -> h @ w
    w_pad = _pad2d(w_t, in_rows, out_pad).astype(w_dtype)        # zero pad, then cast
    b_pad = _pad2d(b.astype(jnp.float32), 1, out_pad)            # bias stays f32
    return w_pad, b_pad


def _choose_tile_b(batch):
    """Batch tile: multiple of 8, never larger than the batch, big enough for
    HBM-roofline efficiency (~85% at 512-1024 rows), and small enough that very
    large batches split into >= 2 grid steps (both v7x TensorCores get work)."""
    if batch <= 8:
        return batch                         # block == full array dim (always legal)
    if batch <= 1024:
        return min(512, (batch // 8) * 8)    # <= batch, multiple of 8
    half = (((batch + 1) // 2) // 8) * 8     # ~half the batch, floored to 8
    return max(256, min(1024, half))


@functools.partial(jax.jit, static_argnames=("use_bf16", "tile_b"))
def net_forward(x_nchw, params, eps, use_bf16=False, tile_b=None):
    """x_nchw: (B, 1, 28, 28); params/eps: 3-tuples of per-layer tuples -> (B, 10) log-probs.

    use_bf16: DMA x and the sampled weights as bf16 (halves dominant HBM traffic,
    bf16 MXU inputs with f32 accumulation).  Recommended on v5e; optional elsewhere.
    """
    batch = x_nchw.shape[0]
    io_dtype = jnp.bfloat16 if use_bf16 else jnp.float32
    x2d = x_nchw.reshape(batch, IN_DIM).astype(io_dtype)         # x.view(-1, 784); no padding

    (p1, p2, p3), (e1, e2, e3) = params, eps
    w1, b1 = _sample_and_pack(p1, e1, IN_DIM, H_PAD, io_dtype)
    w2, b2 = _sample_and_pack(p2, e2, H_PAD, H_PAD, io_dtype)
    w3, b3 = _sample_and_pack(p3, e3, H_PAD, OUT_PAD, io_dtype)

    if tile_b is None:
        tile_b = _choose_tile_b(batch)
    n_tiles = pl.cdiv(batch, tile_b)                             # ragged last tile is fine

    # Advisory cost estimate: helps XLA schedule the sampling fusion around the kernel.
    flops = 2 * batch * (IN_DIM * H_PAD + H_PAD * H_PAD + H_PAD * OUT_PAD)
    weight_bytes = sum(int(a.size) * a.dtype.itemsize for a in (w1, b1, w2, b2, w3, b3))
    bytes_accessed = (batch * IN_DIM * x2d.dtype.itemsize        # x in
                      + batch * OUT_PAD * 4                      # out
                      + weight_bytes)                            # weights DMA'd once
    cost = pl.CostEstimate(flops=flops, transcendentals=batch * OUT_PAD,
                           bytes_accessed=bytes_accessed)

    const = lambda i: (0, 0)   # weights/biases: same block every step -> DMA'd once
    out_pad = pl.pallas_call(
        _mlp_kernel,
        out_shape=jax.ShapeDtypeStruct((batch, OUT_PAD), jnp.float32),
        grid=(n_tiles,),
        in_specs=[
            pl.BlockSpec((tile_b, IN_DIM), lambda i: (i, 0)),   # x: tiled over batch, unpadded
            pl.BlockSpec((IN_DIM, H_PAD), const),               # w1
            pl.BlockSpec((1, H_PAD), const),                    # b1
            pl.BlockSpec((H_PAD, H_PAD), const),                # w2
            pl.BlockSpec((1, H_PAD), const),                    # b2
            pl.BlockSpec((H_PAD, OUT_PAD), const),              # w3
            pl.BlockSpec((1, OUT_PAD), const),                  # b3
        ],
        out_specs=pl.BlockSpec((tile_b, OUT_PAD), lambda i: (i, 0)),
        compiler_params=pltpu.CompilerParams(
            dimension_semantics=("parallel",)),                 # megacore-shard batch on v7x
        cost_estimate=cost,
    )(x2d, w1, b1, w2, b2, w3, b3)

    return out_pad[:, :OUT_DIM]


def init_layer_params(key, in_features, out_features, dtype=jnp.float32):
    """Matches NetLayer.__init__: mu ~ U(-0.1, 0.1), phi = log(exp(1e-4) - 1)."""
    k_w, k_b = jax.random.split(key)
    phi_const = jnp.log(jnp.expm1(jnp.asarray(1e-4, dtype)))
    weight_mu = jax.random.uniform(
        k_w, (out_features, in_features), dtype, minval=-0.1, maxval=0.1)
    weight_phi = jnp.full((out_features, in_features), phi_const, dtype)
    bias_mu = jax.random.uniform(
        k_b, (out_features,), dtype, minval=-0.1, maxval=0.1)
    bias_phi = jnp.full((1, out_features), phi_const, dtype)
    return weight_mu, weight_phi, bias_mu, bias_phi


def sample_eps(key, in_features, out_features, dtype=jnp.float32):
    k_w, k_b = jax.random.split(key)
    eps_w = jax.random.normal(k_w, (out_features, in_features), dtype)
    eps_b = jax.random.normal(k_b, (1, out_features), dtype)
    return eps_w, eps_b


def reference_forward(x_nchw, params, eps):
    """Pure-JAX reference with identical math (f32), for a correctness check."""
    x = x_nchw.reshape(x_nchw.shape[0], IN_DIM).astype(jnp.float32)

    def lin(h, p, e):
        weight_mu, weight_phi, bias_mu, bias_phi = p
        eps_w, eps_b = e
        w = weight_mu + jax.nn.softplus(weight_phi) * eps_w
        b = bias_mu[None, :] + jax.nn.softplus(bias_phi) * eps_b
        return h @ w.T + b

    h1 = lin(x, params[0], eps[0])
    h2 = jax.nn.relu(lin(h1, params[1], eps[1]))
    h3 = jax.nn.relu(lin(h2, params[2], eps[2]))
    return jax.nn.log_softmax(h3, axis=1)


if __name__ == "__main__":
    key = jax.random.PRNGKey(0)
    k_x, k_l1, k_l2, k_l3, k_e1, k_e2, k_e3 = jax.random.split(key, 7)

    batch = 20   # matches BATCHSIZE; not a multiple of 8 -> exercises ragged last tile
    x = jax.random.normal(k_x, (batch, 1, 28, 28), jnp.float32)

    params = (
        init_layer_params(k_l1, IN_DIM, H1),
        init_layer_params(k_l2, H1, H2),
        init_layer_params(k_l3, H2, OUT_DIM),
    )
    eps = (
        sample_eps(k_e1, IN_DIM, H1),
        sample_eps(k_e2, H1, H2),
        sample_eps(k_e3, H2, OUT_DIM),
    )

    ref = reference_forward(x, params, eps)

    # f32 path, forced small tile -> 3 grid steps, last tile ragged (rows 16..19 valid).
    out_multi = jax.block_until_ready(net_forward(x, params, eps, tile_b=8))
    assert out_multi.shape == (batch, OUT_DIM)
    assert jnp.allclose(out_multi, ref, atol=1e-4, rtol=1e-4), "multi-tile mismatch vs reference"

    # f32 path, default tiling (tile_b=16 -> 2 steps, ragged last tile).
    out_def = jax.block_until_ready(net_forward(x, params, eps))
    assert out_def.shape == (batch, OUT_DIM)
    assert jnp.allclose(out_def, ref, atol=1e-4, rtol=1e-4), "default-tile mismatch vs reference"

    # bf16 HBM/MXU path (halved x DMA bytes, f32 accumulation): loose tolerance.
    out_bf16 = jax.block_until_ready(net_forward(x, params, eps, use_bf16=True))
    assert out_bf16.shape == (batch, OUT_DIM)
    assert bool(jnp.all(jnp.isfinite(out_bf16))), "bf16 path produced non-finite values"
    assert float(jnp.max(jnp.abs(out_bf16 - ref))) < 0.15, "bf16 path too far from reference"

    print("KERNEL_OK")
</pallas_src>

<mosaic_0001>
module attributes {stable_mosaic.version = 11 : i64} {
  func.func @_mlp_kernel(%arg0: i32, %arg1: memref<8x784xf32, #tpu.memory_space<vmem>>, %arg2: memref<784x128xf32, #tpu.memory_space<vmem>>, %arg3: memref<1x128xf32, #tpu.memory_space<vmem>>, %arg4: memref<128x128xf32, #tpu.memory_space<vmem>>, %arg5: memref<1x128xf32, #tpu.memory_space<vmem>>, %arg6: memref<128x128xf32, #tpu.memory_space<vmem>>, %arg7: memref<1x128xf32, #tpu.memory_space<vmem>>, %arg8: memref<8x128xf32, #tpu.memory_space<vmem>>) attributes {dimension_semantics = [#tpu.dimension_semantics<parallel>], iteration_bounds = array<i64: 3>, scalar_prefetch = 0 : i64, scratch_operands = 0 : i64, tpu.core_type = #tpu.core_type<tc>, window_params = [{transform_indices = @transform_0, window_bounds = array<i64: 8, 784>}, {pipeline_mode = #tpu.pipeline_mode<synchronous>, transform_indices = @transform_1, window_bounds = array<i64: 784, 128>}, {pipeline_mode = #tpu.pipeline_mode<synchronous>, transform_indices = @transform_2, window_bounds = array<i64: 1, 128>}, {pipeline_mode = #tpu.pipeline_mode<synchronous>, transform_indices = @transform_3, window_bounds = array<i64: 128, 128>}, {pipeline_mode = #tpu.pipeline_mode<synchronous>, transform_indices = @transform_4, window_bounds = array<i64: 1, 128>}, {pipeline_mode = #tpu.pipeline_mode<synchronous>, transform_indices = @transform_5, window_bounds = array<i64: 128, 128>}, {pipeline_mode = #tpu.pipeline_mode<synchronous>, transform_indices = @transform_6, window_bounds = array<i64: 1, 128>}, {transform_indices = @transform_7, window_bounds = array<i64: 8, 128>}]} {
    %c0 = arith.constant 0 : index
    %c0_0 = arith.constant 0 : index
    %0 = vector.load %arg1[%c0, %c0_0] : memref<8x784xf32, #tpu.memory_space<vmem>>, vector<8x784xf32>
    %c0_1 = arith.constant 0 : index
    %c0_2 = arith.constant 0 : index
    %1 = vector.load %arg2[%c0_1, %c0_2] : memref<784x128xf32, #tpu.memory_space<vmem>>, vector<784x128xf32>
    %cst = arith.constant dense<0.000000e+00> : vector<8x128xf32>
    %2 = tpu.matmul %0, %1, %cst {dimension_numbers = #tpu.dot_dimension_numbers<[1], [0], [0], [1], [0, 0, 1, 1], [], []>} : vector<8x784xf32>, vector<784x128xf32>, vector<8x128xf32> -> vector<8x128xf32>
    %c0_3 = arith.constant 0 : index
    %c0_4 = arith.constant 0 : index
    %3 = vector.load %arg3[%c0_3, %c0_4] : memref<1x128xf32, #tpu.memory_space<vmem>>, vector<1x128xf32>
    %4 = vector.broadcast %3 : vector<1x128xf32> to vector<8x128xf32>
    %5 = arith.addf %2, %4 : vector<8x128xf32>
    %c0_5 = arith.constant 0 : index
    %c0_6 = arith.constant 0 : index
    %6 = vector.load %arg4[%c0_5, %c0_6] : memref<128x128xf32, #tpu.memory_space<vmem>>, vector<128x128xf32>
    %cst_7 = arith.constant dense<0.000000e+00> : vector<8x128xf32>
    %7 = tpu.matmul %5, %6, %cst_7 {dimension_numbers = #tpu.dot_dimension_numbers<[1], [0], [0], [1], [0, 0, 1, 1], [], []>} : vector<8x128xf32>, vector<128x128xf32>, vector<8x128xf32> -> vector<8x128xf32>
    %c0_8 = arith.constant 0 : index
    %c0_9 = arith.constant 0 : index
    %8 = vector.load %arg5[%c0_8, %c0_9] : memref<1x128xf32, #tpu.memory_space<vmem>>, vector<1x128xf32>
    %9 = vector.broadcast %8 : vector<1x128xf32> to vector<8x128xf32>
    %10 = arith.addf %7, %9 : vector<8x128xf32>
    %cst_10 = arith.constant 0.000000e+00 : f32
    %11 = vector.broadcast %cst_10 : f32 to vector<8x128xf32>
    %12 = arith.maximumf %10, %11 : vector<8x128xf32>
    %c0_11 = arith.constant 0 : index
    %c0_12 = arith.constant 0 : index
    %13 = vector.load %arg6[%c0_11, %c0_12] : memref<128x128xf32, #tpu.memory_space<vmem>>, vector<128x128xf32>
    %cst_13 = arith.constant dense<0.000000e+00> : vector<8x128xf32>
    %14 = tpu.matmul %12, %13, %cst_13 {dimension_numbers = #tpu.dot_dimension_numbers<[1], [0], [0], [1], [0, 0, 1, 1], [], []>} : vector<8x128xf32>, vector<128x128xf32>, vector<8x128xf32> -> vector<8x128xf32>
    %c0_14 = arith.constant 0 : index
    %c0_15 = arith.constant 0 : index
    %15 = vector.load %arg7[%c0_14, %c0_15] : memref<1x128xf32, #tpu.memory_space<vmem>>, vector<1x128xf32>
    %16 = vector.broadcast %15 : vector<1x128xf32> to vector<8x128xf32>
    %17 = arith.addf %14, %16 : vector<8x128xf32>
    %cst_16 = arith.constant 0.000000e+00 : f32
    %18 = vector.broadcast %cst_16 : f32 to vector<8x128xf32>
    %19 = arith.maximumf %17, %18 : vector<8x128xf32>
    %20 = tpu.iota {dimensions = array<i32: 1>} : vector<8x128xi32>
    %c10_i32 = arith.constant 10 : i32
    %21 = vector.broadcast %c10_i32 : i32 to vector<8x128xi32>
    %22 = arith.cmpi slt, %20, %21 : vector<8x128xi32>
    %cst_17 = arith.constant 0xFF800000 : f32
    %23 = vector.broadcast %cst_17 : f32 to vector<8x128xf32>
    %24 = arith.select %22, %19, %23 : vector<8x128xi1>, vector<8x128xf32>
    %cst_18 = arith.constant dense<0xFF800000> : vector<8xf32>
    %25 = vector.multi_reduction <maximumf>, %24, %cst_18 [1] : vector<8x128xf32> to vector<8xf32>
    %26 = vector.shape_cast %25 : vector<8xf32> to vector<8x1xf32>
    %27 = vector.broadcast %26 : vector<8x1xf32> to vector<8x128xf32>
    %28 = arith.subf %24, %27 : vector<8x128xf32>
    %29 = math.exp %28 : vector<8x128xf32>
    %cst_19 = arith.constant dense<0.000000e+00> : vector<8xf32>
    %30 = vector.multi_reduction <add>, %29, %cst_19 [1] : vector<8x128xf32> to vector<8xf32>
    %31 = vector.shape_cast %30 : vector<8xf32> to vector<8x1xf32>
    %32 = math.log %31 : vector<8x1xf32>
    %33 = arith.addf %32, %26 : vector<8x1xf32>
    %34 = vector.broadcast %33 : vector<8x1xf32> to vector<8x128xf32>
    %35 = arith.subf %19, %34 : vector<8x128xf32>
    %c0_20 = arith.constant 0 : index
    %c0_21 = arith.constant 0 : index
    %36 = vector.load %arg8[%c0_20, %c0_21] : memref<8x128xf32, #tpu.memory_space<vmem>>, vector<8x128xf32>
    tpu.vector_store %arg8[%c0_20, %c0_21], %35 {strides = array<i32>} : memref<8x128xf32, #tpu.memory_space<vmem>>, vector<8x128xf32>,
    return
  }
  func.func @transform_0(%arg0: i32) -> (i32, i32) {
    %c0_i32 = arith.constant 0 : i32
    %c0_i32_0 = arith.constant 0 : i32
    return %arg0, %c0_i32 : i32, i32
  }
  func.func @transform_1(%arg0: i32) -> (i32, i32) {
    %c0_i32 = arith.constant 0 : i32
    %c0_i32_0 = arith.constant 0 : i32
    %c0_i32_1 = arith.constant 0 : i32
    return %c0_i32, %c0_i32_0 : i32, i32
  }
  func.func @transform_2(%arg0: i32) -> (i32, i32) {
    %c0_i32 = arith.constant 0 : i32
    %c0_i32_0 = arith.constant 0 : i32
    %c0_i32_1 = arith.constant 0 : i32
    return %c0_i32, %c0_i32_0 : i32, i32
  }
  func.func @transform_3(%arg0: i32) -> (i32, i32) {
    %c0_i32 = arith.constant 0 : i32
    %c0_i32_0 = arith.constant 0 : i32
    %c0_i32_1 = arith.constant 0 : i32
    return %c0_i32, %c0_i32_0 : i32, i32
  }
  func.func @transform_4(%arg0: i32) -> (i32, i32) {
    %c0_i32 = arith.constant 0 : i32
    %c0_i32_0 = arith.constant 0 : i32
    %c0_i32_1 = arith.constant 0 : i32
    return %c0_i32, %c0_i32_0 : i32, i32
  }
  func.func @transform_5(%arg0: i32) -> (i32, i32) {
    %c0_i32 = arith.constant 0 : i32
    %c0_i32_0 = arith.constant 0 : i32
    %c0_i32_1 = arith.constant 0 : i32
    return %c0_i32, %c0_i32_0 : i32, i32
  }
  func.func @transform_6(%arg0: i32) -> (i32, i32) {
    %c0_i32 = arith.constant 0 : i32
    %c0_i32_0 = arith.constant 0 : i32
    %c0_i32_1 = arith.constant 0 : i32
    return %c0_i32, %c0_i32_0 : i32, i32
  }
  func.func @transform_7(%arg0: i32) -> (i32, i32) {
    %c0_i32 = arith.constant 0 : i32
    %c0_i32_0 = arith.constant 0 : i32
    return %arg0, %c0_i32 : i32, i32
  }
}

</mosaic_0001>

<llo_original>
// kernel: net_forward.1
$region0: #{net_forward.1}
  #allocation0 [shape = 'u32[]', space=smem, size = 0x4, offset = 0x4, fixed_abs, tag = 'smem constant byte address 0x4 - core index']
  #allocation1 [shape = 'u32[144,128]{1,0:T(1,128)}', space=vmem, size = 0x12000, scoped, tag = 'internal scratch']
  %s0 = inlined_call_operand.vmem [shape: f32[20,784], index: 0, kind: input, shape index: {}]
  %s1 = inlined_call_operand.vmem [shape: f32[784,128], index: 1, kind: input, shape index: {}]
  %s2 = inlined_call_operand.vmem [shape: f32[1,128], index: 2, kind: input, shape index: {}]
  %s3 = inlined_call_operand.vmem [shape: f32[128,128], index: 3, kind: input, shape index: {}]
  %s4 = inlined_call_operand.vmem [shape: f32[1,128], index: 4, kind: input, shape index: {}]
  %s5 = inlined_call_operand.vmem [shape: f32[128,128], index: 5, kind: input, shape index: {}]
  %s6 = inlined_call_operand.vmem [shape: f32[1,128], index: 6, kind: input, shape index: {}]
  %s7 = inlined_call_operand.vmem [shape: f32[20,128], index: 7, kind: output, shape index: {}]
  %s8 = sld [smem:[#allocation0]]
  $region61: #{net_forward.1} parent=0
    _
  %s10 = ssub.s32 1, %s8
  %s11 = scalar_select 0, %s10, %s8
  loop: start=0, step=1, limit=5
  $region2: #{net_forward.1} parent=0 // loop_pre_header
    _
  $region3: #{net_forward.1} parent=0 // loop_header
    %s13 = sphi 0, %s17
    %p14 = scmp.ge.s32.totalorder %s13, 5
    %s23 = sphi 0, %s25
    %s26 = sphi 0, %s23
    %s27 = sphi 0, %s26
    %s43 = sphi 0, %s27
    %s47 = sphi 0, %s47
    %s49 = sphi 0, %s47
    %s50 = sphi 0, %s49
    %s64 = sphi 0, %s50
    %s68 = sphi 0, %s68
    %s70 = sphi 0, %s68
    %s71 = sphi 0, %s70
    %s85 = sphi 0, %s71
    %s89 = sphi 0, %s89
    %s91 = sphi 0, %s89
    %s92 = sphi 0, %s91
    %s106 = sphi 0, %s92
    %s110 = sphi 0, %s110
    %s112 = sphi 0, %s110
    %s113 = sphi 0, %s112
    %s127 = sphi 0, %s113
    %s131 = sphi 0, %s131
    %s133 = sphi 0, %s131
    %s134 = sphi 0, %s133
    %s148 = sphi 0, %s134
    %s152 = sphi 0, %s152
    %s154 = sphi 0, %s152
    %s155 = sphi 0, %s154
    %s169 = sphi 0, %s155
    %s175 = sphi 0, %s177
    %s178 = sphi 0, %s175
    %s179 = sphi 0, %s178
    %s195 = sphi 0, %s179
  $region4: #{net_forward.1} parent=0 // loop_header_branch
    %16 = sbr.rel (%p14) target = $region8
  $region5: #{net_forward.1} parent=0 // loop_body
    %s18 = ssub.s32 %s13, 1
    %s19 = ssub.s32 %s13, 2
    %s20 = sadd.s32 %s13, 1
    %s21 = ssub.s32 %s13, %s20
    %p22 = scmp.eq.s32.totalorder %s21, 0
    %s24 = sadd.s32 %s23, 1
    %s25 = scalar_select %p22, %s23, %s24
    %p28 = pneg %p22
    %p29 = scmp.eq.s32.totalorder %s13, 2
    %p30 = por %p28, %p29
    %p31 = scmp.ne.s32.totalorder %s23, %s26
    %p32 = scmp.eq.s32.totalorder %s13, 0
    %p33 = por %p31, %p32
    %p34 = scmp.ne.s32.totalorder %s23, %s26
    %p35 = scmp.eq.s32.totalorder %s18, 2
    %p36 = por %p34, %p35
    %p37 = scmp.ne.s32.totalorder %s26, %s27
    %p38 = scmp.eq.s32.totalorder %s18, 0
    %p39 = por %p37, %p38
    %p40 = scmp.ne.s32.totalorder %s26, %s27
    %p41 = scmp.eq.s32.totalorder %s19, 2
    %p42 = por %p40, %p41
    %p44 = scmp.ne.s32.totalorder %s27, %s43
    %p45 = scmp.eq.s32.totalorder %s19, 0
    %p46 = por %p44, %p45
    %s48 = sadd.s32 %s47, 1
    %p51 = scmp.eq.s32.totalorder %s13, 2
    %p52 = scmp.ne.s32.totalorder %s47, %s49
    %p53 = scmp.eq.s32.totalorder %s13, 0
    %p54 = por %p52, %p53
    %p55 = scmp.ne.s32.totalorder %s47, %s49
    %p56 = scmp.eq.s32.totalorder %s18, 2
    %p57 = por %p55, %p56
    %p58 = scmp.ne.s32.totalorder %s49, %s50
    %p59 = scmp.eq.s32.totalorder %s18, 0
    %p60 = por %p58, %p59
    %p61 = scmp.ne.s32.totalorder %s49, %s50
    %p62 = scmp.eq.s32.totalorder %s19, 2
    %p63 = por %p61, %p62
    %p65 = scmp.ne.s32.totalorder %s50, %s64
    %p66 = scmp.eq.s32.totalorder %s19, 0
    %p67 = por %p65, %p66
    %s69 = sadd.s32 %s68, 1
    %p72 = scmp.eq.s32.totalorder %s13, 2
    %p73 = scmp.ne.s32.totalorder %s68, %s70
    %p74 = scmp.eq.s32.totalorder %s13, 0
    %p75 = por %p73, %p74
    %p76 = scmp.ne.s32.totalorder %s68, %s70
    %p77 = scmp.eq.s32.totalorder %s18, 2
    %p78 = por %p76, %p77
    %p79 = scmp.ne.s32.totalorder %s70, %s71
    %p80 = scmp.eq.s32.totalorder %s18, 0
    %p81 = por %p79, %p80
    %p82 = scmp.ne.s32.totalorder %s70, %s71
    %p83 = scmp.eq.s32.totalorder %s19, 2
    %p84 = por %p82, %p83
    %p86 = scmp.ne.s32.totalorder %s71, %s85
    %p87 = scmp.eq.s32.totalorder %s19, 0
    %p88 = por %p86, %p87
    %s90 = sadd.s32 %s89, 1
    %p93 = scmp.eq.s32.totalorder %s13, 2
    %p94 = scmp.ne.s32.totalorder %s89, %s91
    %p95 = scmp.eq.s32.totalorder %s13, 0
    %p96 = por %p94, %p95
    %p97 = scmp.ne.s32.totalorder %s89, %s91
    %p98 = scmp.eq.s32.totalorder %s18, 2
    %p99 = por %p97, %p98
    %p100 = scmp.ne.s32.totalorder %s91, %s92
    %p101 = scmp.eq.s32.totalorder %s18, 0
    %p102 = por %p100, %p101
    %p103 = scmp.ne.s32.totalorder %s91, %s92
    %p104 = scmp.eq.s32.totalorder %s19, 2
    %p105 = por %p103, %p104
    %p107 = scmp.ne.s32.totalorder %s92, %s106
    %p108 = scmp.eq.s32.totalorder %s19, 0
    %p109 = por %p107, %p108
    %s111 = sadd.s32 %s110, 1
    %p114 = scmp.eq.s32.totalorder %s13, 2
    %p115 = scmp.ne.s32.totalorder %s110, %s112
    %p116 = scmp.eq.s32.totalorder %s13, 0
    %p117 = por %p115, %p116
    %p118 = scmp.ne.s32.totalorder %s110, %s112
    %p119 = scmp.eq.s32.totalorder %s18, 2
    %p120 = por %p118, %p119
    %p121 = scmp.ne.s32.totalorder %s112, %s113
    %p122 = scmp.eq.s32.totalorder %s18, 0
    %p123 = por %p121, %p122
    %p124 = scmp.ne.s32.totalorder %s112, %s113
    %p125 = scmp.eq.s32.totalorder %s19, 2
    %p126 = por %p124, %p125
    %p128 = scmp.ne.s32.totalorder %s113, %s127
    %p129 = scmp.eq.s32.totalorder %s19, 0
    %p130 = por %p128, %p129
    %s132 = sadd.s32 %s131, 1
    %p135 = scmp.eq.s32.totalorder %s13, 2
    %p136 = scmp.ne.s32.totalorder %s131, %s133
    %p137 = scmp.eq.s32.totalorder %s13, 0
    %p138 = por %p136, %p137
    %p139 = scmp.ne.s32.totalorder %s131, %s133
    %p140 = scmp.eq.s32.totalorder %s18, 2
    %p141 = por %p139, %p140
    %p142 = scmp.ne.s32.totalorder %s133, %s134
    %p143 = scmp.eq.s32.totalorder %s18, 0
    %p144 = por %p142, %p143
    %p145 = scmp.ne.s32.totalorder %s133, %s134
    %p146 = scmp.eq.s32.totalorder %s19, 2
    %p147 = por %p145, %p146
    %p149 = scmp.ne.s32.totalorder %s134, %s148
    %p150 = scmp.eq.s32.totalorder %s19, 0
    %p151 = por %p149, %p150
    %s153 = sadd.s32 %s152, 1
    %p156 = scmp.eq.s32.totalorder %s13, 2
    %p157 = scmp.ne.s32.totalorder %s152, %s154
    %p158 = scmp.eq.s32.totalorder %s13, 0
    %p159 = por %p157, %p158
    %p160 = scmp.ne.s32.totalorder %s152, %s154
    %p161 = scmp.eq.s32.totalorder %s18, 2
    %p162 = por %p160, %p161
    %p163 = scmp.ne.s32.totalorder %s154, %s155
    %p164 = scmp.eq.s32.totalorder %s18, 0
    %p165 = por %p163, %p164
    %p166 = scmp.ne.s32.totalorder %s154, %s155
    %p167 = scmp.eq.s32.totalorder %s19, 2
    %p168 = por %p166, %p167
    %p170 = scmp.ne.s32.totalorder %s155, %s169
    %p171 = scmp.eq.s32.totalorder %s19, 0
    %p172 = por %p170, %p171
    %s173 = ssub.s32 %s13, %s20
    %p174 = scmp.eq.s32.totalorder %s173, 0
    %s176 = sadd.s32 %s175, 1
    %s177 = scalar_select %p174, %s175, %s176
    %p180 = pneg %p174
    %p181 = scmp.eq.s32.totalorder %s13, 2
    %p182 = por %p180, %p181
    %p183 = scmp.ne.s32.totalorder %s175, %s178
    %p184 = scmp.eq.s32.totalorder %s13, 0
    %p185 = por %p183, %p184
    %p186 = scmp.ne.s32.totalorder %s175, %s178
    %p187 = scmp.eq.s32.totalorder %s18, 2
    %p188 = por %p186, %p187
    %p189 = scmp.ne.s32.totalorder %s178, %s179
    %p190 = scmp.eq.s32.totalorder %s18, 0
    %p191 = por %p189, %p190
    %p192 = scmp.ne.s32.totalorder %s178, %s179
    %p193 = scmp.eq.s32.totalorder %s19, 2
    %p194 = por %p192, %p193
    %p196 = scmp.ne.s32.totalorder %s179, %s195
    %p197 = scmp.eq.s32.totalorder %s19, 0
    %p198 = por %p196, %p197
    %p199 = scmp.le.s32.totalorder 1, %s13
    %p200 = scmp.lt.s32.totalorder %s13, 4
    %p201 = pnand %p199, %p200
    %p202 = pneg %p201
    // Predicated region
    $region9: #{net_forward.1} parent=5 // pred_check
      _
    $region10: #{net_forward.1} parent=5 // pred_check_branch
      %204 = sbr.rel (%p201) target = $region12
    $region11: #{net_forward.1} parent=5 // pred_region
      %s205 = ssub.s32 %s13, 1
      // Predicated region
      $region13: #{net_forward.1} parent=11 // pred_check
        %p206 = pneg %p60
      $region14: #{net_forward.1} parent=11 // pred_check_branch
        %208 = sbr.rel (%p206) target = $region16
      $region15: #{net_forward.1} parent=11 // pred_region
        _
      $region16: #{net_forward.1} parent=11 // pred_fallthru
        _
      // Predicated region
      $region17: #{net_forward.1} parent=11 // pred_check
        %p209 = pneg %p81
      $region18: #{net_forward.1} parent=11 // pred_check_branch
        %211 = sbr.rel (%p209) target = $region20
      $region19: #{net_forward.1} parent=11 // pred_region
        _
      $region20: #{net_forward.1} parent=11 // pred_fallthru
        _
      // Predicated region
      $region21: #{net_forward.1} parent=11 // pred_check
        %p212 = pneg %p102
      $region22: #{net_forward.1} parent=11 // pred_check_branch
        %214 = sbr.rel (%p212) target = $region24
      $region23: #{net_forward.1} parent=11 // pred_region
        _
      $region24: #{net_forward.1} parent=11 // pred_fallthru
        _
      // Predicated region
      $region25: #{net_forward.1} parent=11 // pred_check
        %p215 = pneg %p123
      $region26: #{net_forward.1} parent=11 // pred_check_branch
        %217 = sbr.rel (%p215) target = $region28
      $region27: #{net_forward.1} parent=11 // pred_region
        _
      $region28: #{net_forward.1} parent=11 // pred_fallthru
        _
      // Predicated region
      $region29: #{net_forward.1} parent=11 // pred_check
        %p218 = pneg %p144
      $region30: #{net_forward.1} parent=11 // pred_check_branch
        %220 = sbr.rel (%p218) target = $region32
      $region31: #{net_forward.1} parent=11 // pred_region
        _
      $region32: #{net_forward.1} parent=11 // pred_fallthru
        _
      // Predicated region
      $region33: #{net_forward.1} parent=11 // pred_check
        %p221 = pneg %p165
      $region34: #{net_forward.1} parent=11 // pred_check_branch
        %223 = sbr.rel (%p221) target = $region36
      $region35: #{net_forward.1} parent=11 // pred_region
        _
      $region36: #{net_forward.1} parent=11 // pred_fallthru
        _
    $region12: #{net_forward.1} parent=5 // pred_fallthru
      _
    %p224 = scmp.lt.s32.totalorder %s13, 3
    // Predicated region
    $region37: #{net_forward.1} parent=5 // pred_check
      %p225 = pneg %p224
    $region38: #{net_forward.1} parent=5 // pred_check_branch
      %227 = sbr.rel (%p225) target = $region40
    $region39: #{net_forward.1} parent=5 // pred_region
      // Predicated region
      $region41: #{net_forward.1} parent=39 // pred_check
        %p228 = pneg %p33
      $region42: #{net_forward.1} parent=39 // pred_check_branch
        %230 = sbr.rel (%p228) target = $region44
      $region43: #{net_forward.1} parent=39 // pred_region
        %p231 = scmp.lt.s32.totalorder %s13, 2
        %s232 = scalar_select %p231, %s13, 2
        %s233 = smul.addr %s232, 7
        %s234 = smul.addr %s233, 8
        %s235 = scalar_lea.vmem %s0, %s234
      $region44: #{net_forward.1} parent=39 // pred_fallthru
        _
    $region40: #{net_forward.1} parent=5 // pred_fallthru
      _
    %p236 = scmp.le.s32.totalorder 1, %s13
    %p237 = scmp.lt.s32.totalorder %s13, 4
    %p238 = pnand %p236, %p237
    %p239 = pneg %p238
    // Predicated region
    $region45: #{net_forward.1} parent=5 // pred_check
      _
    $region46: #{net_forward.1} parent=5 // pred_check_branch
      %241 = sbr.rel (%p238) target = $region48
    $region47: #{net_forward.1} parent=5 // pred_region
      %s242 = ssub.s32 %s13, 1
      %p243 = scmp.lt.s32.totalorder %s18, 2
      %s244 = scalar_select %p243, %s18, 2
      %s245 = smul.addr %s244, 7
      %s246 = smul.addr %s245, 8
      %s247 = scalar_lea.vmem %s0, %s246
      %p248 = pneg %p39
      %p249 = pneg %p36
      %p250 = pneg %p60
      %p251 = pneg %p57
      %p252 = pneg %p81
      %p253 = pneg %p78
      %p254 = pneg %p102
      %p255 = pneg %p99
      %p256 = pneg %p123
      %p257 = pneg %p120
      %p258 = pneg %p144
      %p259 = pneg %p141
      %p260 = pneg %p165
      %p261 = pneg %p162
      %p262 = pneg %p191
      %p263 = pneg %p188
      %p264 = scmp.lt.s32.totalorder %s18, 2
      %s265 = scalar_select %p264, %s18, 2
      %s266 = smul.addr %s265, 8
      %s267 = scalar_lea.vmem %s7, %s266
      %p268 = scmp.lt.s32.totalorder %s18, 2
      %s269 = scalar_select %p268, %s18, 2
      %s270 = smul.addr %s269, 7
      %s271 = smul.addr %s270, 8
      %s272 = scalar_lea.vmem %s0, %s271
      %p273 = scmp.lt.s32.totalorder %s18, 2
      %s274 = scalar_select %p273, %s18, 2
      %s275 = smul.addr %s274, 8
      %s276 = scalar_lea.vmem %s7, %s275
      %v277 = vld [vmem:[%s272] sm:$0xff]
      %v278 = vld [vmem:[%s272 + $0x8] sm:$0xff]
      %v279 = vld [vmem:[%s272 + $0x10] sm:$0xff]
      %v280 = vld [vmem:[%s272 + $0x18] sm:$0xff]
      %v281 = vld [vmem:[%s272 + $0x20] sm:$0xff]
      %v282 = vld [vmem:[%s272 + $0x28] sm:$0xff]
      %v283 = vld [vmem:[%s272 + $0x30] sm:$0xff]
      %v284 = vld [vmem:[%s1] sm:$0xff]
      %v285 = vld [vmem:[%s1 + $0x8] sm:$0xff]
      %v286 = vld [vmem:[%s1 + $0x10] sm:$0xff]
      %v287 = vld [vmem:[%s1 + $0x18] sm:$0xff]
      %v288 = vld [vmem:[%s1 + $0x20] sm:$0xff]
      %v289 = vld [vmem:[%s1 + $0x28] sm:$0xff]
      %v290 = vld [vmem:[%s1 + $0x30] sm:$0xff]
      %v291 = vld [vmem:[%s1 + $0x38] sm:$0xff]
      %v292 = vld [vmem:[%s1 + $0x40] sm:$0xff]
      %v293 = vld [vmem:[%s1 + $0x48] sm:$0xff]
      %v294 = vld [vmem:[%s1 + $0x50] sm:$0xff]
      %v295 = vld [vmem:[%s1 + $0x58] sm:$0xff]
      %v296 = vld [vmem:[%s1 + $0x60] sm:$0xff]
      %v297 = vld [vmem:[%s1 + $0x68] sm:$0xff]
      %v298 = vld [vmem:[%s1 + $0x70] sm:$0xff]
      %v299 = vld [vmem:[%s1 + $0x78] sm:$0xff]
      %v300 = vld [vmem:[%s1 + $0x80] sm:$0xff]
      %v301 = vld [vmem:[%s1 + $0x88] sm:$0xff]
      %v302 = vld [vmem:[%s1 + $0x90] sm:$0xff]
      %v303 = vld [vmem:[%s1 + $0x98] sm:$0xff]
      %v304 = vld [vmem:[%s1 + $0xa0] sm:$0xff]
      %v305 = vld [vmem:[%s1 + $0xa8] sm:$0xff]
      %v306 = vld [vmem:[%s1 + $0xb0] sm:$0xff]
      %v307 = vld [vmem:[%s1 + $0xb8] sm:$0xff]
      %v308 = vld [vmem:[%s1 + $0xc0] sm:$0xff]
      %v309 = vld [vmem:[%s1 + $0xc8] sm:$0xff]
      %v310 = vld [vmem:[%s1 + $0xd0] sm:$0xff]
      %v311 = vld [vmem:[%s1 + $0xd8] sm:$0xff]
      %v312 = vld [vmem:[%s1 + $0xe0] sm:$0xff]
      %v313 = vld [vmem:[%s1 + $0xe8] sm:$0xff]
      %v314 = vld [vmem:[%s1 + $0xf0] sm:$0xff]
      %v315 = vld [vmem:[%s1 + $0xf8] sm:$0xff]
      %v316 = vld [vmem:[%s1 + $0x100] sm:$0xff]
      %v317 = vld [vmem:[%s1 + $0x108] sm:$0xff]
      %v318 = vld [vmem:[%s1 + $0x110] sm:$0xff]
      %v319 = vld [vmem:[%s1 + $0x118] sm:$0xff]
      %v320 = vld [vmem:[%s1 + $0x120] sm:$0xff]
      %v321 = vld [vmem:[%s1 + $0x128] sm:$0xff]
      %v322 = vld [vmem:[%s1 + $0x130] sm:$0xff]
      %v323 = vld [vmem:[%s1 + $0x138] sm:$0xff]
      %v324 = vld [vmem:[%s1 + $0x140] sm:$0xff]
      %v325 = vld [vmem:[%s1 + $0x148] sm:$0xff]
      %v326 = vld [vmem:[%s1 + $0x150] sm:$0xff]
      %v327 = vld [vmem:[%s1 + $0x158] sm:$0xff]
      %v328 = vld [vmem:[%s1 + $0x160] sm:$0xff]
      %v329 = vld [vmem:[%s1 + $0x168] sm:$0xff]
      %v330 = vld [vmem:[%s1 + $0x170] sm:$0xff]
      %v331 = vld [vmem:[%s1 + $0x178] sm:$0xff]
      %v332 = vld [vmem:[%s1 + $0x180] sm:$0xff]
      %v333 = vld [vmem:[%s1 + $0x188] sm:$0xff]
      %v334 = vld [vmem:[%s1 + $0x190] sm:$0xff]
      %v335 = vld [vmem:[%s1 + $0x198] sm:$0xff]
      %v336 = vld [vmem:[%s1 + $0x1a0] sm:$0xff]
      %v337 = vld [vmem:[%s1 + $0x1a8] sm:$0xff]
      %v338 = vld [vmem:[%s1 + $0x1b0] sm:$0xff]
      %v339 = vld [vmem:[%s1 + $0x1b8] sm:$0xff]
      %v340 = vld [vmem:[%s1 + $0x1c0] sm:$0xff]
      %v341 = vld [vmem:[%s1 + $0x1c8] sm:$0xff]
      %v342 = vld [vmem:[%s1 + $0x1d0] sm:$0xff]
      %v343 = vld [vmem:[%s1 + $0x1d8] sm:$0xff]
      %v344 = vld [vmem:[%s1 + $0x1e0] sm:$0xff]
      %v345 = vld [vmem:[%s1 + $0x1e8] sm:$0xff]
      %v346 = vld [vmem:[%s1 + $0x1f0] sm:$0xff]
      %v347 = vld [vmem:[%s1 + $0x1f8] sm:$0xff]
      %v348 = vld [vmem:[%s1 + $0x200] sm:$0xff]
      %v349 = vld [vmem:[%s1 + $0x208] sm:$0xff]
      %v350 = vld [vmem:[%s1 + $0x210] sm:$0xff]
      %v351 = vld [vmem:[%s1 + $0x218] sm:$0xff]
      %v352 = vld [vmem:[%s1 + $0x220] sm:$0xff]
      %v353 = vld [vmem:[%s1 + $0x228] sm:$0xff]
      %v354 = vld [vmem:[%s1 + $0x230] sm:$0xff]
      %v355 = vld [vmem:[%s1 + $0x238] sm:$0xff]
      %v356 = vld [vmem:[%s1 + $0x240] sm:$0xff]
      %v357 = vld [vmem:[%s1 + $0x248] sm:$0xff]
      %v358 = vld [vmem:[%s1 + $0x250] sm:$0xff]
      %v359 = vld [vmem:[%s1 + $0x258] sm:$0xff]
      %v360 = vld [vmem:[%s1 + $0x260] sm:$0xff]
      %v361 = vld [vmem:[%s1 + $0x268] sm:$0xff]
      %v362 = vld [vmem:[%s1 + $0x270] sm:$0xff]
      %v363 = vld [vmem:[%s1 + $0x278] sm:$0xff]
      %v364 = vld [vmem:[%s1 + $0x280] sm:$0xff]
      %v365 = vld [vmem:[%s1 + $0x288] sm:$0xff]
      %v366 = vld [vmem:[%s1 + $0x290] sm:$0xff]
      %v367 = vld [vmem:[%s1 + $0x298] sm:$0xff]
      %v368 = vld [vmem:[%s1 + $0x2a0] sm:$0xff]
      %v369 = vld [vmem:[%s1 + $0x2a8] sm:$0xff]
      %v370 = vld [vmem:[%s1 + $0x2b0] sm:$0xff]
      %v371 = vld [vmem:[%s1 + $0x2b8] sm:$0xff]
      %v372 = vld [vmem:[%s1 + $0x2c0] sm:$0xff]
      %v373 = vld [vmem:[%s1 + $0x2c8] sm:$0xff]
      %v374 = vld [vmem:[%s1 + $0x2d0] sm:$0xff]
      %v375 = vld [vmem:[%s1 + $0x2d8] sm:$0xff]
      %v376 = vld [vmem:[%s1 + $0x2e0] sm:$0xff]
      %v377 = vld [vmem:[%s1 + $0x2e8] sm:$0xff]
      %v378 = vld [vmem:[%s1 + $0x2f0] sm:$0xff]
      %v379 = vld [vmem:[%s1 + $0x2f8] sm:$0xff]
      %v380 = vld [vmem:[%s1 + $0x300] sm:$0xff]
      %v381 = vld [vmem:[%s1 + $0x308] sm:$0xff]
      %v382 = vld [vmem:[%s2] sm:$0x1]
      %v384 = vlaneseq
      %v385 = vshrl.u32 %v384, 7
      %v386 = vsub.s32 0, %v385
      %v387 = vrot.slane %v382, %v386
      %vm389 = vcmask 130048
      %v391 = vsel %vm389, %v283, 0
      %393 = vmatprep.subr.mxu0 0.0
      %394 = vmatpush1.msra.mxu0 %v299
      %395 = vmatprep.subr.mxu0 0.0
      %396 = vmatpush1.msra.mxu0 %v298
      %397 = vmatprep.subr.mxu0 0.0
      %398 = vmatpush1.msra.mxu0 %v297
      %399 = vmatprep.subr.mxu0 0.0
      %400 = vmatpush1.msra.mxu0 %v296
      %401 = vmatprep.subr.mxu0 0.0
      %402 = vmatpush1.msra.mxu0 %v295
      %403 = vmatprep.subr.mxu0 0.0
      %404 = vmatpush1.msra.mxu0 %v294
      %405 = vmatprep.subr.mxu0 0.0
      %406 = vmatpush1.msra.mxu0 %v293
      %407 = vmatprep.subr.mxu0 0.0
      %408 = vmatpush1.msra.mxu0 %v292
      %409 = vmatprep.subr.mxu0 0.0
      %410 = vmatpush1.msra.mxu0 %v291
      %411 = vmatprep.subr.mxu0 0.0
      %412 = vmatpush1.msra.mxu0 %v290
      %413 = vmatprep.subr.mxu0 0.0
      %414 = vmatpush1.msra.mxu0 %v289
      %415 = vmatprep.subr.mxu0 0.0
      %416 = vmatpush1.msra.mxu0 %v288
      %417 = vmatprep.subr.mxu0 0.0
      %418 = vmatpush1.msra.mxu0 %v287
      %419 = vmatprep.subr.mxu0 0.0
      %420 = vmatpush1.msra.mxu0 %v286
      %421 = vmatprep.subr.mxu0 0.0
      %422 = vmatpush1.msra.mxu0 %v285
      %423 = vmatprep.subr.mxu0 0.0
      %424 = vmatpush1.msra.mxu0 %v284
      %425 = vmatprep.subr.mxu0 0.0
      %426 = vmatpush2.msra.mxu0 %v315
      %427 = vmatprep.subr.mxu0 0.0
      %428 = vmatpush2.msra.mxu0 %v314
      %429 = vmatprep.subr.mxu0 0.0
      %430 = vmatpush2.msra.mxu0 %v313
      %431 = vmatprep.subr.mxu0 0.0
      %432 = vmatpush2.msra.mxu0 %v312
      %433 = vmatprep.subr.mxu0 0.0
      %434 = vmatpush2.msra.mxu0 %v311
      %435 = vmatprep.subr.mxu0 0.0
      %436 = vmatpush2.msra.mxu0 %v310
      %437 = vmatprep.subr.mxu0 0.0
      %438 = vmatpush2.msra.mxu0 %v309
      %439 = vmatprep.subr.mxu0 0.0
      %440 = vmatpush2.msra.mxu0 %v308
      %441 = vmatprep.subr.mxu0 0.0
      %442 = vmatpush2.msra.mxu0 %v307
      %443 = vmatprep.subr.mxu0 0.0
      %444 = vmatpush2.msra.mxu0 %v306
      %445 = vmatprep.subr.mxu0 0.0
      %446 = vmatpush2.msra.mxu0 %v305
      %447 = vmatprep.subr.mxu0 0.0
      %448 = vmatpush2.msra.mxu0 %v304
      %449 = vmatprep.subr.mxu0 0.0
      %450 = vmatpush2.msra.mxu0 %v303
      %451 = vmatprep.subr.mxu0 0.0
      %452 = vmatpush2.msra.mxu0 %v302
      %453 = vmatprep.subr.mxu0 0.0
      %454 = vmatpush2.msra.mxu0 %v301
      %455 = vmatprep.subr.mxu0 0.0
      %456 = vmatpush2.msra.mxu0 %v300
      %457 = vmatprep.mubr.f32.mxu0 %v278
      %458 = vmatmul.mubr.f32.gmra.mxu0 %v277
      %v459 = vpop.f32.mrf.mxu0
      %v460 = vadd.f32 %v387, %v459
      %v461 = vpop.f32.mrf.mxu0
      %462 = vdwg.mxu0
      %463 = vmatprep.subr.mxu0 0.0
      %464 = vmatpush1.msra.mxu0 %v331
      %465 = vmatprep.subr.mxu0 0.0
      %466 = vmatpush1.msra.mxu0 %v330
      %467 = vmatprep.subr.mxu0 0.0
      %468 = vmatpush1.msra.mxu0 %v329
      %469 = vmatprep.subr.mxu0 0.0
      %470 = vmatpush1.msra.mxu0 %v328
      %471 = vmatprep.subr.mxu0 0.0
      %472 = vmatpush1.msra.mxu0 %v327
      %473 = vmatprep.subr.mxu0 0.0
      %474 = vmatpush1.msra.mxu0 %v326
      %475 = vmatprep.subr.mxu0 0.0
      %476 = vmatpush1.msra.mxu0 %v325
      %477 = vmatprep.subr.mxu0 0.0
      %478 = vmatpush1.msra.mxu0 %v324
      %479 = vmatprep.subr.mxu0 0.0
      %480 = vmatpush1.msra.mxu0 %v323
      %481 = vmatprep.subr.mxu0 0.0
      %482 = vmatpush1.msra.mxu0 %v322
      %483 = vmatprep.subr.mxu0 0.0
      %484 = vmatpush1.msra.mxu0 %v321
      %485 = vmatprep.subr.mxu0 0.0
      %486 = vmatpush1.msra.mxu0 %v320
      %487 = vmatprep.subr.mxu0 0.0
      %488 = vmatpush1.msra.mxu0 %v319
      %489 = vmatprep.subr.mxu0 0.0
      %490 = vmatpush1.msra.mxu0 %v318
      %491 = vmatprep.subr.mxu0 0.0
      %492 = vmatpush1.msra.mxu0 %v317
      %493 = vmatprep.subr.mxu0 0.0
      %494 = vmatpush1.msra.mxu0 %v316
      %495 = vmatprep.subr.mxu0 0.0
      %496 = vmatpush2.msra.mxu0 %v347
      %497 = vmatprep.subr.mxu0 0.0
      %498 = vmatpush2.msra.mxu0 %v346
      %499 = vmatprep.subr.mxu0 0.0
      %500 = vmatpush2.msra.mxu0 %v345
      %501 = vmatprep.subr.mxu0 0.0
      %502 = vmatpush2.msra.mxu0 %v344
      %503 = vmatprep.subr.mxu0 0.0
      %504 = vmatpush2.msra.mxu0 %v343
      %505 = vmatprep.subr.mxu0 0.0
      %506 = vmatpush2.msra.mxu0 %v342
      %507 = vmatprep.subr.mxu0 0.0
      %508 = vmatpush2.msra.mxu0 %v341
      %509 = vmatprep.subr.mxu0 0.0
      %510 = vmatpush2.msra.mxu0 %v340
      %511 = vmatprep.subr.mxu0 0.0
      %512 = vmatpush2.msra.mxu0 %v339
      %513 = vmatprep.subr.mxu0 0.0
      %514 = vmatpush2.msra.mxu0 %v338
      %515 = vmatprep.subr.mxu0 0.0
      %516 = vmatpush2.msra.mxu0 %v337
      %517 = vmatprep.subr.mxu0 0.0
      %518 = vmatpush2.msra.mxu0 %v336
      %519 = vmatprep.subr.mxu0 0.0
      %520 = vmatpush2.msra.mxu0 %v335
      %521 = vmatprep.subr.mxu0 0.0
      %522 = vmatpush2.msra.mxu0 %v334
      %523 = vmatprep.subr.mxu0 0.0
      %524 = vmatpush2.msra.mxu0 %v333
      %525 = vmatprep.subr.mxu0 0.0
      %526 = vmatpush2.msra.mxu0 %v332
      %527 = vmatprep.mubr.f32.mxu0 %v280
      %528 = vmatmul.mubr.f32.gmra.mxu0 %v279
      %v529 = vpop.f32.mrf.mxu0
      %v530 = vadd.f32 %v460, %v529
      %v531 = vpop.f32.mrf.mxu0
      %532 = vdwg.mxu0
      %533 = vmatprep.subr.mxu0 0.0
      %534 = vmatpush1.msra.mxu0 %v363
      %535 = vmatprep.subr.mxu0 0.0
      %536 = vmatpush1.msra.mxu0 %v362
      %537 = vmatprep.subr.mxu0 0.0
      %538 = vmatpush1.msra.mxu0 %v361
      %539 = vmatprep.subr.mxu0 0.0
      %540 = vmatpush1.msra.mxu0 %v360
      %541 = vmatprep.subr.mxu0 0.0
      %542 = vmatpush1.msra.mxu0 %v359
      %543 = vmatprep.subr.mxu0 0.0
      %544 = vmatpush1.msra.mxu0 %v358
      %545 = vmatprep.subr.mxu0 0.0
      %546 = vmatpush1.msra.mxu0 %v357
      %547 = vmatprep.subr.mxu0 0.0
      %548 = vmatpush1.msra.mxu0 %v356
      %549 = vmatprep.subr.mxu0 0.0
      %550 = vmatpush1.msra.mxu0 %v355
      %551 = vmatprep.subr.mxu0 0.0
      %552 = vmatpush1.msra.mxu0 %v354
      %553 = vmatprep.subr.mxu0 0.0
      %554 = vmatpush1.msra.mxu0 %v353
      %555 = vmatprep.subr.mxu0 0.0
      %556 = vmatpush1.msra.mxu0 %v352
      %557 = vmatprep.subr.mxu0 0.0
      %558 = vmatpush1.msra.mxu0 %v351
      %559 = vmatprep.subr.mxu0 0.0
      %560 = vmatpush1.msra.mxu0 %v350
      %561 = vmatprep.subr.mxu0 0.0
      %562 = vmatpush1.msra.mxu0 %v349
      %563 = vmatprep.subr.mxu0 0.0
      %564 = vmatpush1.msra.mxu0 %v348
      %565 = vmatprep.subr.mxu0 0.0
      %566 = vmatpush2.msra.mxu0 %v379
      %567 = vmatprep.subr.mxu0 0.0
      %568 = vmatpush2.msra.mxu0 %v378
      %569 = vmatprep.subr.mxu0 0.0
      %570 = vmatpush2.msra.mxu0 %v377
      %571 = vmatprep.subr.mxu0 0.0
      %572 = vmatpush2.msra.mxu0 %v376
      %573 = vmatprep.subr.mxu0 0.0
      %574 = vmatpush2.msra.mxu0 %v375
      %575 = vmatprep.subr.mxu0 0.0
      %576 = vmatpush2.msra.mxu0 %v374
      %577 = vmatprep.subr.mxu0 0.0
      %578 = vmatpush2.msra.mxu0 %v373
      %579 = vmatprep.subr.mxu0 0.0
      %580 = vmatpush2.msra.mxu0 %v372
      %581 = vmatprep.subr.mxu0 0.0
      %582 = vmatpush2.msra.mxu0 %v371
      %583 = vmatprep.subr.mxu0 0.0
      %584 = vmatpush2.msra.mxu0 %v370
      %585 = vmatprep.subr.mxu0 0.0
      %586 = vmatpush2.msra.mxu0 %v369
      %587 = vmatprep.subr.mxu0 0.0
      %588 = vmatpush2.msra.mxu0 %v368
      %589 = vmatprep.subr.mxu0 0.0
      %590 = vmatpush2.msra.mxu0 %v367
      %591 = vmatprep.subr.mxu0 0.0
      %592 = vmatpush2.msra.mxu0 %v366
      %593 = vmatprep.subr.mxu0 0.0
      %594 = vmatpush2.msra.mxu0 %v365
      %595 = vmatprep.subr.mxu0 0.0
      %596 = vmatpush2.msra.mxu0 %v364
      %597 = vmatprep.mubr.f32.mxu0 %v282
      %598 = vmatmul.mubr.f32.gmra.mxu0 %v281
      %v599 = vpop.f32.mrf.mxu0
      %v600 = vadd.f32 %v530, %v599
      %v601 = vpop.f32.mrf.mxu0
      %602 = vdwg.mxu0
      %603 = vmatprep.subr.mxu0 0.0
      %604 = vmatpush1.msra.mxu0 0.0
      %605 = vmatprep.subr.mxu0 0.0
      %606 = vmatpush1.msra.mxu0 0.0
      %607 = vmatprep.subr.mxu0 0.0
      %608 = vmatpush1.msra.mxu0 0.0
      %609 = vmatprep.subr.mxu0 0.0
      %610 = vmatpush1.msra.mxu0 0.0
      %611 = vmatprep.subr.mxu0 0.0
      %612 = vmatpush1.msra.mxu0 0.0
      %613 = vmatprep.subr.mxu0 0.0
      %614 = vmatpush1.msra.mxu0 0.0
      %615 = vmatprep.subr.mxu0 0.0
      %616 = vmatpush1.msra.mxu0 0.0
      %617 = vmatprep.subr.mxu0 0.0
      %618 = vmatpush1.msra.mxu0 0.0
      %619 = vmatprep.subr.mxu0 0.0
      %620 = vmatpush1.msra.mxu0 0.0
      %621 = vmatprep.subr.mxu0 0.0
      %622 = vmatpush1.msra.mxu0 0.0
      %623 = vmatprep.subr.mxu0 0.0
      %624 = vmatpush1.msra.mxu0 0.0
      %625 = vmatprep.subr.mxu0 0.0
      %626 = vmatpush1.msra.mxu0 0.0
      %627 = vmatprep.subr.mxu0 0.0
      %628 = vmatpush1.msra.mxu0 0.0
      %629 = vmatprep.subr.mxu0 0.0
      %630 = vmatpush1.msra.mxu0 0.0
      %631 = vmatprep.subr.mxu0 0.0
      %632 = vmatpush1.msra.mxu0 %v381
      %633 = vmatprep.subr.mxu0 0.0
      %634 = vmatpush1.msra.mxu0 %v380
      %635 = vmatprep.subr.mxu0 0.0
      %636 = vmatpush2.msra.mxu0 0.0
      %637 = vmatprep.subr.mxu0 0.0
      %638 = vmatpush2.msra.mxu0 0.0
      %639 = vmatprep.subr.mxu0 0.0
      %640 = vmatpush2.msra.mxu0 0.0
      %641 = vmatprep.subr.mxu0 0.0
      %642 = vmatpush2.msra.mxu0 0.0
      %643 = vmatprep.subr.mxu0 0.0
      %644 = vmatpush2.msra.mxu0 0.0
      %645 = vmatprep.subr.mxu0 0.0
      %646 = vmatpush2.msra.mxu0 0.0
      %647 = vmatprep.subr.mxu0 0.0
      %648 = vmatpush2.msra.mxu0 0.0
      %649 = vmatprep.subr.mxu0 0.0
      %650 = vmatpush2.msra.mxu0 0.0
      %651 = vmatprep.subr.mxu0 0.0
      %652 = vmatpush2.msra.mxu0 0.0
      %653 = vmatprep.subr.mxu0 0.0
      %654 = vmatpush2.msra.mxu0 0.0
      %655 = vmatprep.subr.mxu0 0.0
      %656 = vmatpush2.msra.mxu0 0.0
      %657 = vmatprep.subr.mxu0 0.0
      %658 = vmatpush2.msra.mxu0 0.0
      %659 = vmatprep.subr.mxu0 0.0
      %660 = vmatpush2.msra.mxu0 0.0
      %661 = vmatprep.subr.mxu0 0.0
      %662 = vmatpush2.msra.mxu0 0.0
      %663 = vmatprep.subr.mxu0 0.0
      %664 = vmatpush2.msra.mxu0 0.0
      %665 = vmatprep.subr.mxu0 0.0
      %666 = vmatpush2.msra.mxu0 0.0
      %667 = vmatprep.mubr.f32.mxu0 0.0
      %668 = vmatmul.mubr.f32.gmra.mxu0 %v391
      %v669 = vpop.f32.mrf.mxu0
      %v670 = vadd.f32 %v600, %v669
      %v671 = vpop.f32.mrf.mxu0
      %672 = vdwg.mxu0
      %v673 = vld [vmem:[%s3] sm:$0xff]
      %v674 = vld [vmem:[%s3 + $0x8] sm:$0xff]
      %v675 = vld [vmem:[%s3 + $0x10] sm:$0xff]
      %v676 = vld [vmem:[%s3 + $0x18] sm:$0xff]
      %v677 = vld [vmem:[%s3 + $0x20] sm:$0xff]
      %v678 = vld [vmem:[%s3 + $0x28] sm:$0xff]
      %v679 = vld [vmem:[%s3 + $0x30] sm:$0xff]
      %v680 = vld [vmem:[%s3 + $0x38] sm:$0xff]
      %v681 = vld [vmem:[%s3 + $0x40] sm:$0xff]
      %v682 = vld [vmem:[%s3 + $0x48] sm:$0xff]
      %v683 = vld [vmem:[%s3 + $0x50] sm:$0xff]
      %v684 = vld [vmem:[%s3 + $0x58] sm:$0xff]
      %v685 = vld [vmem:[%s3 + $0x60] sm:$0xff]
      %v686 = vld [vmem:[%s3 + $0x68] sm:$0xff]
      %v687 = vld [vmem:[%s3 + $0x70] sm:$0xff]
      %v688 = vld [vmem:[%s3 + $0x78] sm:$0xff]
      %v689 = vld [vmem:[%s4] sm:$0x1]
      %v691 = vlaneseq
      %v692 = vshrl.u32 %v691, 7
      %v693 = vsub.s32 0, %v692
      %v694 = vrot.slane %v689, %v693
      %696 = vmatprep.subr.mxu0 0.0
      %697 = vmatpush1.msra.mxu0 %v688
      %698 = vmatprep.subr.mxu0 0.0
      %699 = vmatpush1.msra.mxu0 %v687
      %700 = vmatprep.subr.mxu0 0.0
      %701 = vmatpush1.msra.mxu0 %v686
      %702 = vmatprep.subr.mxu0 0.0
      %703 = vmatpush1.msra.mxu0 %v685
      %704 = vmatprep.subr.mxu0 0.0
      %705 = vmatpush1.msra.mxu0 %v684
      %706 = vmatprep.subr.mxu0 0.0
      %707 = vmatpush1.msra.mxu0 %v683
      %708 = vmatprep.subr.mxu0 0.0
      %709 = vmatpush1.msra.mxu0 %v682
      %710 = vmatprep.subr.mxu0 0.0
      %711 = vmatpush1.msra.mxu0 %v681
      %712 = vmatprep.subr.mxu0 0.0
      %713 = vmatpush1.msra.mxu0 %v680
      %714 = vmatprep.subr.mxu0 0.0
      %715 = vmatpush1.msra.mxu0 %v679
      %716 = vmatprep.subr.mxu0 0.0
      %717 = vmatpush1.msra.mxu0 %v678
      %718 = vmatprep.subr.mxu0 0.0
      %719 = vmatpush1.msra.mxu0 %v677
      %720 = vmatprep.subr.mxu0 0.0
      %721 = vmatpush1.msra.mxu0 %v676
      %722 = vmatprep.subr.mxu0 0.0
      %723 = vmatpush1.msra.mxu0 %v675
      %724 = vmatprep.subr.mxu0 0.0
      %725 = vmatpush1.msra.mxu0 %v674
      %726 = vmatprep.subr.mxu0 0.0
      %727 = vmatpush1.msra.mxu0 %v673
      %728 = vmatprep.subr.mxu0 0.0
      %729 = vmatpush2.msra.mxu0 0.0
      %730 = vmatprep.subr.mxu0 0.0
      %731 = vmatpush2.msra.mxu0 0.0
      %732 = vmatprep.subr.mxu0 0.0
      %733 = vmatpush2.msra.mxu0 0.0
      %734 = vmatprep.subr.mxu0 0.0
      %735 = vmatpush2.msra.mxu0 0.0
      %736 = vmatprep.subr.mxu0 0.0
      %737 = vmatpush2.msra.mxu0 0.0
      %738 = vmatprep.subr.mxu0 0.0
      %739 = vmatpush2.msra.mxu0 0.0
      %740 = vmatprep.subr.mxu0 0.0
      %741 = vmatpush2.msra.mxu0 0.0
      %742 = vmatprep.subr.mxu0 0.0
      %743 = vmatpush2.msra.mxu0 0.0
      %744 = vmatprep.subr.mxu0 0.0
      %745 = vmatpush2.msra.mxu0 0.0
      %746 = vmatprep.subr.mxu0 0.0
      %747 = vmatpush2.msra.mxu0 0.0
      %748 = vmatprep.subr.mxu0 0.0
      %749 = vmatpush2.msra.mxu0 0.0
      %750 = vmatprep.subr.mxu0 0.0
      %751 = vmatpush2.msra.mxu0 0.0
      %752 = vmatprep.subr.mxu0 0.0
      %753 = vmatpush2.msra.mxu0 0.0
      %754 = vmatprep.subr.mxu0 0.0
      %755 = vmatpush2.msra.mxu0 0.0
      %756 = vmatprep.subr.mxu0 0.0
      %757 = vmatpush2.msra.mxu0 0.0
      %758 = vmatprep.subr.mxu0 0.0
      %759 = vmatpush2.msra.mxu0 0.0
      %760 = vmatprep.mubr.f32.mxu0 0.0
      %761 = vmatmul.mubr.f32.gmra.mxu0 %v670
      %v762 = vpop.f32.mrf.mxu0
      %v763 = vadd.f32 %v694, %v762
      %v764 = vpop.f32.mrf.mxu0
      %765 = vdwg.mxu0
      %v766 = vmax.f32 %v763, 0.0
      %v767 = vld [vmem:[%s5] sm:$0xff]
      %v768 = vld [vmem:[%s5 + $0x8] sm:$0xff]
      %v769 = vld [vmem:[%s5 + $0x10] sm:$0xff]
      %v770 = vld [vmem:[%s5 + $0x18] sm:$0xff]
      %v771 = vld [vmem:[%s5 + $0x20] sm:$0xff]
      %v772 = vld [vmem:[%s5 + $0x28] sm:$0xff]
      %v773 = vld [vmem:[%s5 + $0x30] sm:$0xff]
      %v774 = vld [vmem:[%s5 + $0x38] sm:$0xff]
      %v775 = vld [vmem:[%s5 + $0x40] sm:$0xff]
      %v776 = vld [vmem:[%s5 + $0x48] sm:$0xff]
      %v777 = vld [vmem:[%s5 + $0x50] sm:$0xff]
      %v778 = vld [vmem:[%s5 + $0x58] sm:$0xff]
      %v779 = vld [vmem:[%s5 + $0x60] sm:$0xff]
      %v780 = vld [vmem:[%s5 + $0x68] sm:$0xff]
      %v781 = vld [vmem:[%s5 + $0x70] sm:$0xff]
      %v782 = vld [vmem:[%s5 + $0x78] sm:$0xff]
      %v783 = vld [vmem:[%s6] sm:$0x1]
      %v785 = vlaneseq
      %v786 = vshrl.u32 %v785, 7
      %v787 = vsub.s32 0, %v786
      %v788 = vrot.slane %v783, %v787
      %790 = vmatprep.subr.mxu0 0.0
      %791 = vmatpush1.msra.mxu0 %v782
      %792 = vmatprep.subr.mxu0 0.0
      %793 = vmatpush1.msra.mxu0 %v781
      %794 = vmatprep.subr.mxu0 0.0
      %795 = vmatpush1.msra.mxu0 %v780
      %796 = vmatprep.subr.mxu0 0.0
      %797 = vmatpush1.msra.mxu0 %v779
      %798 = vmatprep.subr.mxu0 0.0
      %799 = vmatpush1.msra.mxu0 %v778
      %800 = vmatprep.subr.mxu0 0.0
      %801 = vmatpush1.msra.mxu0 %v777
      %802 = vmatprep.subr.mxu0 0.0
      %803 = vmatpush1.msra.mxu0 %v776
      %804 = vmatprep.subr.mxu0 0.0
      %805 = vmatpush1.msra.mxu0 %v775
      %806 = vmatprep.subr.mxu0 0.0
      %807 = vmatpush1.msra.mxu0 %v774
      %808 = vmatprep.subr.mxu0 0.0
      %809 = vmatpush1.msra.mxu0 %v773
      %810 = vmatprep.subr.mxu0 0.0
      %811 = vmatpush1.msra.mxu0 %v772
      %812 = vmatprep.subr.mxu0 0.0
      %813 = vmatpush1.msra.mxu0 %v771
      %814 = vmatprep.subr.mxu0 0.0
      %815 = vmatpush1.msra.mxu0 %v770
      %816 = vmatprep.subr.mxu0 0.0
      %817 = vmatpush1.msra.mxu0 %v769
      %818 = vmatprep.subr.mxu0 0.0
      %819 = vmatpush1.msra.mxu0 %v768
      %820 = vmatprep.subr.mxu0 0.0
      %821 = vmatpush1.msra.mxu0 %v767
      %822 = vmatprep.subr.mxu0 0.0
      %823 = vmatpush2.msra.mxu0 0.0
      %824 = vmatprep.subr.mxu0 0.0
      %825 = vmatpush2.msra.mxu0 0.0
      %826 = vmatprep.subr.mxu0 0.0
      %827 = vmatpush2.msra.mxu0 0.0
      %828 = vmatprep.subr.mxu0 0.0
      %829 = vmatpush2.msra.mxu0 0.0
      %830 = vmatprep.subr.mxu0 0.0
      %831 = vmatpush2.msra.mxu0 0.0
      %832 = vmatprep.subr.mxu0 0.0
      %833 = vmatpush2.msra.mxu0 0.0
      %834 = vmatprep.subr.mxu0 0.0
      %835 = vmatpush2.msra.mxu0 0.0
      %836 = vmatprep.subr.mxu0 0.0
      %837 = vmatpush2.msra.mxu0 0.0
      %838 = vmatprep.subr.mxu0 0.0
      %839 = vmatpush2.msra.mxu0 0.0
      %840 = vmatprep.subr.mxu0 0.0
      %841 = vmatpush2.msra.mxu0 0.0
      %842 = vmatprep.subr.mxu0 0.0
      %843 = vmatpush2.msra.mxu0 0.0
      %844 = vmatprep.subr.mxu0 0.0
      %845 = vmatpush2.msra.mxu0 0.0
      %846 = vmatprep.subr.mxu0 0.0
      %847 = vmatpush2.msra.mxu0 0.0
      %848 = vmatprep.subr.mxu0 0.0
      %849 = vmatpush2.msra.mxu0 0.0
      %850 = vmatprep.subr.mxu0 0.0
      %851 = vmatpush2.msra.mxu0 0.0
      %852 = vmatprep.subr.mxu0 0.0
      %853 = vmatpush2.msra.mxu0 0.0
      %854 = vmatprep.mubr.f32.mxu0 0.0
      %855 = vmatmul.mubr.f32.gmra.mxu0 %v766
      %v856 = vpop.f32.mrf.mxu0
      %v857 = vadd.f32 %v788, %v856
      %v858 = vpop.f32.mrf.mxu0
      %859 = vdwg.mxu0
      %v860 = vmax.f32 %v857, 0.0
      %v861 = vlaneseq
      %v862 = vand.u32 %v861, 127
      %vm863 = vcmp.lt.s32.totalorder %v862, 10
      %v864 = vsel %vm863, %v860, -inf
      %865 = vmax.xlane.f32.xlu0 %v864
      %v866 = vpop.xlane.xlu0 %865
      %v867 = vsub.f32 %v864, %v866
      %v868 = vmul.f32 %v867, 1.442695
      %v869 = vpow.pop %v868
      %870 = vadd.xlane.f32.xlu0 %v869
      %v871 = vpop.xlane.xlu0 %870
      %v872 = vlog2.pop %v871
      %v873 = vmul.f32 %v872, 0.6931472
      %v874 = vadd.f32 %v873, %v866
      %v875 = vsub.f32 %v860, %v874
      %876 = vst [vmem:[%s276] sm:$0xff] %v875
      %p877 = scmp.lt.s32.totalorder %s18, 2
      %s878 = scalar_select %p877, %s18, 2
      %s879 = smul.addr %s878, 8
      %s880 = scalar_lea.vmem %s7, %s879
      // Predicated region
      $region49: #{net_forward.1} parent=47 // pred_check
        %p881 = pneg %p188
      $region50: #{net_forward.1} parent=47 // pred_check_branch
        %883 = sbr.rel (%p881) target = $region52
      $region51: #{net_forward.1} parent=47 // pred_region
        _
      $region52: #{net_forward.1} parent=47 // pred_fallthru
        _
    $region48: #{net_forward.1} parent=5 // pred_fallthru
      _
    %p884 = scmp.le.s32.totalorder 2, %s13
    // Predicated region
    $region53: #{net_forward.1} parent=5 // pred_check
      %p885 = pneg %p884
    $region54: #{net_forward.1} parent=5 // pred_check_branch
      %887 = sbr.rel (%p885) target = $region56
    $region55: #{net_forward.1} parent=5 // pred_region
      %s888 = ssub.s32 %s13, 2
      // Predicated region
      $region57: #{net_forward.1} parent=55 // pred_check
        %p889 = pneg %p194
      $region58: #{net_forward.1} parent=55 // pred_check_branch
        %891 = sbr.rel (%p889) target = $region60
      $region59: #{net_forward.1} parent=55 // pred_region
        %p892 = scmp.lt.s32.totalorder %s19, 2
        %s893 = scalar_select %p892, %s19, 2
        %s894 = smul.addr %s893, 8
        %s895 = scalar_lea.vmem %s7, %s894
      $region60: #{net_forward.1} parent=55 // pred_fallthru
        _
    $region56: #{net_forward.1} parent=5 // pred_fallthru
      _
  $region6: #{net_forward.1} parent=0 // loop_footer
    %s17 = sadd.s32 1, %s13
  $region7: #{net_forward.1} parent=0 // loop_footer_branch
    %12 = sbr.rel target = $region3
  $region8: #{net_forward.1} parent=0 // loop_exit
    _

</llo_original>
